<compile_context>
chip_gen: v6e
topology: v6e:2x2x1
jax: 0.10.0
libtpu: 0.0.40
codegen_flags: <defaults>
</compile_context>

<pallas_src>
import functools

import jax
import jax.numpy as jnp
from jax.experimental import pallas as pl
from jax.experimental.pallas import tpu as pltpu


def _residual_kernel(x_ref, w_ref, params_ref, out_ref, *, eps, o_features):
    # x_ref:      (N, I)  input activations
    # w_ref:      (I, O)  bf16 weight (pre-transposed from PyTorch (O, I) at init)
    # params_ref: (2, O)  rows = [gamma, beta]  (Linear bias is cancelled by BN)
    # out_ref:    (N, O + I) = concat([relu(bn(x @ W^T)), x], axis=1)
    x = x_ref[...]

    # Linear (bias-free; bias is exactly removed by the batch-mean subtraction).
    # bf16 operands -> native MXU rate on v5e/v6e/v7x; f32 accumulation.
    h = jnp.dot(
        x.astype(jnp.bfloat16),
        w_ref[...],
        preferred_element_type=jnp.float32,
    )

    gamma = params_ref[0:1, :]  # (1, O)
    beta = params_ref[1:2, :]   # (1, O)

    # BatchNorm1d (training mode): batch mean / biased batch variance over axis 0.
    n = h.shape[0]
    inv_n = 1.0 / n
    mean = jnp.sum(h, axis=0, keepdims=True) * inv_n
    diff = h - mean
    var = jnp.sum(diff * diff, axis=0, keepdims=True) * inv_n

    # Folded affine: one row-op for scale, then a single (N,O) mul-add pass.
    scale = gamma * jax.lax.rsqrt(var + eps)   # (1, O), EUP rsqrt
    y = diff * scale + beta

    # ReLU
    y = jnp.maximum(y, 0.0)

    # concat([out, input_], dim=1) as two direct slice stores (no temporary).
    out_ref[:, :o_features] = y.astype(out_ref.dtype)
    out_ref[:, o_features:] = x.astype(out_ref.dtype)


def prepare_residual_params(w, b, gamma, beta):
    """One-time (init-time) parameter preparation.

    w: (O, I) PyTorch Linear.weight layout; b: (O,) Linear.bias (unused: BN batch
    stats cancel it exactly); gamma/beta: (O,) BatchNorm weight/bias.
    Returns (w_io_bf16, params) where w_io_bf16 is (I, O) bf16 and params is
    (2, O) f32 rows [gamma, beta]. Do NOT call this per forward pass.
    """
    del b  # mathematically cancelled by training-mode BN mean subtraction
    w_io = jnp.asarray(w).T.astype(jnp.bfloat16)          # (I, O), once
    params = jnp.stack([gamma, beta], axis=0).astype(jnp.float32)  # (2, O), once
    return w_io, params


def residual_forward(x, w_io_bf16, params, *, eps=1e-5):
    """x: (N, I); w_io_bf16: (I, O) bf16; params: (2, O) [gamma, beta]."""
    N, I = x.shape
    O = w_io_bf16.shape[1]

    kernel = functools.partial(_residual_kernel, eps=eps, o_features=O)
    out_shape = jax.ShapeDtypeStruct((N, O + I), x.dtype)

    # Small shapes: single grid point, everything resident in VMEM.
    return pl.pallas_call(
        kernel,
        out_shape=out_shape,
        in_specs=[pl.BlockSpec(memory_space=pltpu.MemorySpace.VMEM)] * 3,
        out_specs=pl.BlockSpec(memory_space=pltpu.MemorySpace.VMEM),
    )(x, w_io_bf16, params)


def residual_reference_f32(x, w, b, gamma, beta, *, eps=1e-5):
    """Pure-f32 reference matching the PyTorch module forward (training-mode BN)."""
    h = x @ w.T + b
    mean = jnp.mean(h, axis=0, keepdims=True)
    var = jnp.mean((h - mean) ** 2, axis=0, keepdims=True)
    y = (h - mean) / jnp.sqrt(var + eps) * gamma + beta
    y = jnp.maximum(y, 0.0)
    return jnp.concatenate([y, x], axis=1)


def residual_reference_bf16_mm(x, w_io_bf16, gamma, beta, *, eps=1e-5):
    """Reference with the same bf16 matmul operands (isolates MXU-path rounding)."""
    h = jnp.dot(x.astype(jnp.bfloat16), w_io_bf16, preferred_element_type=jnp.float32)
    mean = jnp.mean(h, axis=0, keepdims=True)
    var = jnp.mean((h - mean) ** 2, axis=0, keepdims=True)
    y = (h - mean) * (gamma * jax.lax.rsqrt(var + eps)) + beta
    y = jnp.maximum(y, 0.0)
    return jnp.concatenate([y, x], axis=1)


if __name__ == "__main__":
    # Small, deterministic synthetic shapes: batch=8, in_features=32, out_features=64.
    N, I, O = 8, 32, 64
    key = jax.random.PRNGKey(0)
    kx, kw, kb, kg, kbe = jax.random.split(key, 5)

    x = jax.random.normal(kx, (N, I), dtype=jnp.float32)
    w = jax.random.normal(kw, (O, I), dtype=jnp.float32) * 0.1   # Linear.weight (O, I)
    b = jax.random.normal(kb, (O,), dtype=jnp.float32) * 0.1     # Linear.bias
    gamma = 1.0 + 0.1 * jax.random.normal(kg, (O,), dtype=jnp.float32)  # bn.weight
    beta = 0.1 * jax.random.normal(kbe, (O,), dtype=jnp.float32)        # bn.bias

    # One-time parameter prep (hoisted out of the per-call path).
    w_io_bf16, params = prepare_residual_params(w, b, gamma, beta)

    out = residual_forward(x, w_io_bf16, params)
    out = jax.block_until_ready(out)

    assert out.shape == (N, O + I), out.shape

    # Tight check vs. a reference using the same bf16 matmul operands.
    ref_bf16 = residual_reference_bf16_mm(x, w_io_bf16, gamma, beta)
    assert jnp.allclose(out, ref_bf16, atol=1e-4, rtol=1e-4), "mismatch vs bf16-mm reference"

    # Semantic check vs. the pure-f32 PyTorch-equivalent forward (bf16 matmul tolerance).
    ref_f32 = residual_reference_f32(x, w, b, gamma, beta)
    assert jnp.allclose(out, ref_f32, atol=3e-2, rtol=3e-2), "mismatch vs f32 reference"

    print("KERNEL_OK")
</pallas_src>

<mosaic_0001>
module attributes {stable_mosaic.version = 11 : i64} {
  func.func @_residual_kernel(%arg0: memref<8x32xf32, #tpu.memory_space<vmem>>, %arg1: memref<32x64xbf16, #tpu.memory_space<vmem>>, %arg2: memref<2x64xf32, #tpu.memory_space<vmem>>, %arg3: memref<8x96xf32, #tpu.memory_space<vmem>>) attributes {dimension_semantics = [], scalar_prefetch = 0 : i64, scratch_operands = 0 : i64, tpu.core_type = #tpu.core_type<tc>} {
    %c0 = arith.constant 0 : index
    %c0_0 = arith.constant 0 : index
    %0 = vector.load %arg0[%c0, %c0_0] : memref<8x32xf32, #tpu.memory_space<vmem>>, vector<8x32xf32>
    %1 = arith.truncf %0 : vector<8x32xf32> to vector<8x32xbf16>
    %c0_1 = arith.constant 0 : index
    %c0_2 = arith.constant 0 : index
    %2 = vector.load %arg1[%c0_1, %c0_2] : memref<32x64xbf16, #tpu.memory_space<vmem>>, vector<32x64xbf16>
    %cst = arith.constant dense<0.000000e+00> : vector<8x64xf32>
    %3 = tpu.matmul %1, %2, %cst {dimension_numbers = #tpu.dot_dimension_numbers<[1], [0], [0], [1], [0, 0, 1, 1], [], []>} : vector<8x32xbf16>, vector<32x64xbf16>, vector<8x64xf32> -> vector<8x64xf32>
    %c0_3 = arith.constant 0 : index
    %c0_4 = arith.constant 0 : index
    %4 = vector.load %arg2[%c0_3, %c0_4] : memref<2x64xf32, #tpu.memory_space<vmem>>, vector<1x64xf32>
    %c1 = arith.constant 1 : index
    %c0_5 = arith.constant 0 : index
    %5 = vector.load %arg2[%c1, %c0_5] : memref<2x64xf32, #tpu.memory_space<vmem>>, vector<1x64xf32>
    %cst_6 = arith.constant dense<0.000000e+00> : vector<64xf32>
    %6 = vector.multi_reduction <add>, %3, %cst_6 [0] : vector<8x64xf32> to vector<64xf32>
    %7 = vector.shape_cast %6 : vector<64xf32> to vector<1x64xf32>
    %cst_7 = arith.constant 1.250000e-01 : f32
    %8 = vector.broadcast %cst_7 : f32 to vector<1x64xf32>
    %9 = arith.mulf %7, %8 : vector<1x64xf32>
    %10 = vector.broadcast %9 : vector<1x64xf32> to vector<8x64xf32>
    %11 = arith.subf %3, %10 : vector<8x64xf32>
    %12 = arith.mulf %11, %11 : vector<8x64xf32>
    %cst_8 = arith.constant dense<0.000000e+00> : vector<64xf32>
    %13 = vector.multi_reduction <add>, %12, %cst_8 [0] : vector<8x64xf32> to vector<64xf32>
    %14 = vector.shape_cast %13 : vector<64xf32> to vector<1x64xf32>
    %cst_9 = arith.constant 1.250000e-01 : f32
    %15 = vector.broadcast %cst_9 : f32 to vector<1x64xf32>
    %16 = arith.mulf %14, %15 : vector<1x64xf32>
    %cst_10 = arith.constant 9.99999974E-6 : f32
    %17 = vector.broadcast %cst_10 : f32 to vector<1x64xf32>
    %18 = arith.addf %16, %17 : vector<1x64xf32>
    %19 = math.rsqrt %18 : vector<1x64xf32>
    %20 = arith.mulf %4, %19 : vector<1x64xf32>
    %21 = vector.broadcast %20 : vector<1x64xf32> to vector<8x64xf32>
    %22 = arith.mulf %11, %21 : vector<8x64xf32>
    %23 = vector.broadcast %5 : vector<1x64xf32> to vector<8x64xf32>
    %24 = arith.addf %22, %23 : vector<8x64xf32>
    %cst_11 = arith.constant 0.000000e+00 : f32
    %25 = vector.broadcast %cst_11 : f32 to vector<8x64xf32>
    %26 = arith.maximumf %24, %25 : vector<8x64xf32>
    %c0_12 = arith.constant 0 : index
    %c0_13 = arith.constant 0 : index
    %27 = vector.load %arg3[%c0_12, %c0_13] : memref<8x96xf32, #tpu.memory_space<vmem>>, vector<8x64xf32>
    tpu.vector_store %arg3[%c0_12, %c0_13], %26 {strides = array<i32>} : memref<8x96xf32, #tpu.memory_space<vmem>>, vector<8x64xf32>,
    %c0_14 = arith.constant 0 : index
    %c64 = arith.constant 64 : index
    %28 = vector.load %arg3[%c0_14, %c64] : memref<8x96xf32, #tpu.memory_space<vmem>>, vector<8x32xf32>
    tpu.vector_store %arg3[%c0_14, %c64], %0 {strides = array<i32>} : memref<8x96xf32, #tpu.memory_space<vmem>>, vector<8x32xf32>,
    return
  }
}

</mosaic_0001>

<llo_original>
// kernel: tpu_custom_call.1
$region0: #{tpu_custom_call.1}
  #allocation0 [shape = 'u32[]', space=smem, size = 0x4, offset = 0x4, fixed_abs, tag = 'smem constant byte address 0x4 - core index']
  #allocation1 [shape = 'u32[144,128]{1,0:T(1,128)}', space=vmem, size = 0x12000, scoped, tag = 'internal scratch']
  %s0 = inlined_call_operand.hbm [shape: f32[8,32], index: 0, kind: input, shape index: {}]
  %s1 = inlined_call_operand.hbm [shape: bf16[32,64], index: 1, kind: input, shape index: {}]
  %s2 = inlined_call_operand.vmem [shape: f32[2,64], index: 2, kind: input, shape index: {}]
  %s3 = inlined_call_operand.hbm [shape: f32[8,96], index: 3, kind: output, shape index: {}]
  %s4 = sld [smem:[#allocation0]]
  $region30: #{tpu_custom_call.1} parent=0
    _
  %s6 = ssub.s32 1, %s4
  %s7 = scalar_select 0, %s6, %s4
  $region1: #{tpu_custom_call.1} parent=0
    #allocation2 [shape = 'u8[4096]{0}', space=vmem, size = 0x1000, scoped, tag = 'input window, operand 0, single buffered']
    #allocation3 [shape = 's32[1]{0}', space=sflag, size = 0x4, scoped, tag = 'scoped memory for tpu_custom_call.1']
    #allocation4 [shape = 's32[1]{0}', space=sflag, size = 0x4, scoped, tag = 'scoped memory for tpu_custom_call.1']
    #allocation5 [shape = 'u8[8192]{0}', space=vmem, size = 0x2000, scoped, tag = 'input window, operand 1, single buffered']
    #allocation6 [shape = 's32[1]{0}', space=sflag, size = 0x4, scoped, tag = 'scoped memory for tpu_custom_call.1']
    #allocation7 [shape = 'u8[4096]{0}', space=vmem, size = 0x1000, scoped, tag = 'output window, operand 0, single buffered']
    %8 = vsyncpa [#allocation3], 0
    %9 = vsyncpa [#allocation6], 0
    %10 = vsyncpa [#allocation4], 0
    // Predicated region
    $region2: #{tpu_custom_call.1} parent=1 // pred_check
      _
    $region3: #{tpu_custom_call.1} parent=1 // pred_check_branch
      %12 = sbr.rel (0) target = $region5
    $region4: #{tpu_custom_call.1} parent=1 // pred_region
      %s14 = ssub.s32 128, 128
      %15 = vsyncadd [#allocation3], %s14
      %s17 = sshll.u32 [#allocation2], 4
      %s18 = int_to_ptr.vmem [resolvable:$true] %s17
      %20 = dma.hbm_to_vmem [thread:$0]  %s0, 128, %s18, [#allocation3]
    $region5: #{tpu_custom_call.1} parent=1 // pred_fallthru
      _
    // Predicated region
    $region6: #{tpu_custom_call.1} parent=1 // pred_check
      _
    $region7: #{tpu_custom_call.1} parent=1 // pred_check_branch
      %22 = sbr.rel (0) target = $region9
    $region8: #{tpu_custom_call.1} parent=1 // pred_region
      %s24 = ssub.s32 256, 256
      %25 = vsyncadd [#allocation6], %s24
      %s26 = sshll.u32 [#allocation5], 4
      %s27 = int_to_ptr.vmem [resolvable:$true] %s26
      %32 = dma.hbm_to_vmem [thread:$0]  %s1, 256, %s27, [#allocation6], 64, 64, 4
    $region9: #{tpu_custom_call.1} parent=1 // pred_fallthru
      _
    // Predicated region
    $region10: #{tpu_custom_call.1} parent=1 // pred_check
      _
    $region11: #{tpu_custom_call.1} parent=1 // pred_check_branch
      %34 = sbr.rel (0) target = $region13
    $region12: #{tpu_custom_call.1} parent=1 // pred_region
      _
    $region13: #{tpu_custom_call.1} parent=1 // pred_fallthru
      _
    // Predicated region
    $region14: #{tpu_custom_call.1} parent=1 // pred_check
      _
    $region15: #{tpu_custom_call.1} parent=1 // pred_check_branch
      %36 = sbr.rel (0) target = $region17
    $region16: #{tpu_custom_call.1} parent=1 // pred_region
      %37 = dma.done [#allocation3], 128
    $region17: #{tpu_custom_call.1} parent=1 // pred_fallthru
      _
    // Predicated region
    $region18: #{tpu_custom_call.1} parent=1 // pred_check
      _
    $region19: #{tpu_custom_call.1} parent=1 // pred_check_branch
      %39 = sbr.rel (0) target = $region21
    $region20: #{tpu_custom_call.1} parent=1 // pred_region
      %40 = dma.done [#allocation6], 256
    $region21: #{tpu_custom_call.1} parent=1 // pred_fallthru
      _
    %v42 = vld [vmem:[#allocation2] sm:$0xff]
    %v43 = vpack.c.bf16 %v42, %v42
    %v44 = vld [vmem:[#allocation5] sm:$0xf]
    %v45 = vld [vmem:[#allocation5 + $0x4] sm:$0xf]
    %v46 = vld [vmem:[#allocation5 + $0x8] sm:$0xf]
    %v47 = vld [vmem:[#allocation5 + $0xc] sm:$0xf]
    %v52 = vunpack.c.l.b16 %v44
    %v53 = vunpack.c.l.b16 %v45
    %v54 = vunpack.c.l.b16 %v46
    %v55 = vunpack.c.l.b16 %v47
    %v56 = vpack.c.b16 %v53, %v52
    %v57 = vpack.c.b16 %v55, %v54
    %vm60 = vcmask 261120
    %v62 = vsel %vm60, %v43, 0
    %64 = vmatprep.subr.bf16.mxu0 0
    %65 = vmatpush1.bf16.msra.mxu0 0
    %66 = vmatprep.subr.bf16.mxu0 0
    %67 = vmatpush1.bf16.msra.mxu0 0
    %68 = vmatprep.subr.bf16.mxu0 0
    %69 = vmatpush1.bf16.msra.mxu0 0
    %70 = vmatprep.subr.bf16.mxu0 0
    %71 = vmatpush1.bf16.msra.mxu0 0
    %72 = vmatprep.subr.bf16.mxu0 0
    %73 = vmatpush1.bf16.msra.mxu0 0
    %74 = vmatprep.subr.bf16.mxu0 0
    %75 = vmatpush1.bf16.msra.mxu0 0
    %76 = vmatprep.subr.bf16.mxu0 0
    %77 = vmatpush1.bf16.msra.mxu0 %v57
    %78 = vmatprep.subr.bf16.mxu0 0
    %79 = vmatpush1.bf16.msra.mxu0 %v56
    %80 = vmatprep.subr.bf16.mxu0 0
    %81 = vmatpush2.bf16.msra.mxu0 0
    %82 = vmatprep.subr.bf16.mxu0 0
    %83 = vmatpush2.bf16.msra.mxu0 0
    %84 = vmatprep.subr.bf16.mxu0 0
    %85 = vmatpush2.bf16.msra.mxu0 0
    %86 = vmatprep.subr.bf16.mxu0 0
    %87 = vmatpush2.bf16.msra.mxu0 0
    %88 = vmatprep.subr.bf16.mxu0 0
    %89 = vmatpush2.bf16.msra.mxu0 0
    %90 = vmatprep.subr.bf16.mxu0 0
    %91 = vmatpush2.bf16.msra.mxu0 0
    %92 = vmatprep.subr.bf16.mxu0 0
    %93 = vmatpush2.bf16.msra.mxu0 0
    %94 = vmatprep.subr.bf16.mxu0 0
    %95 = vmatpush2.bf16.msra.mxu0 0
    %96 = vmatprep.mubr.bf16.mxu0 0
    %97 = vmatmul.mubr.bf16.gmra.mxu0 %v62
    %v98 = vpop.f32.mrf.mxu0
    %v99 = vadd.f32 0.0, %v98
    %v100 = vpop.f32.mrf.mxu0
    %v101 = vpop.f32.mrf.mxu0
    %v102 = vpop.f32.mrf.mxu0
    %103 = vdwg.mxu0
    %v104 = vld [vmem:[%s2] sm:$0x1]
    %v105 = vld [vmem:[%s2 + $0x1] sm:$0x1]
    %vm106 = vcmask 523264
    %v107 = vsel %vm106, %v99, 0.0
    %v108 = vrot.slane %v107, 4
    %v109 = vadd.f32 %v107, %v108
    %v110 = vrot.slane %v109, 2
    %v111 = vadd.f32 %v109, %v110
    %v112 = vrot.slane %v111, 1
    %v113 = vadd.f32 %v111, %v112
    %v114 = vmul.f32 %v113, 0.125
    %v115 = vsub.f32 %v99, %v114
    %v116 = vmul.f32 %v115, %v115
    %v117 = vsel %vm106, %v116, 0.0
    %v118 = vrot.slane %v117, 4
    %v119 = vadd.f32 %v117, %v118
    %v120 = vrot.slane %v119, 2
    %v121 = vadd.f32 %v119, %v120
    %v122 = vrot.slane %v121, 1
    %v123 = vadd.f32 %v121, %v122
    %v124 = vmul.f32 %v123, 0.125
    %v125 = vadd.f32 %v124, 1e-05
    %v126 = vrsqrt.pop %v125
    %v127 = vmul.f32 %v104, %v126
    %v128 = vlaneseq
    %v129 = vshrl.u32 %v128, 7
    %v130 = vsub.s32 0, %v129
    %v131 = vrot.slane %v127, %v130
    %v132 = vmul.f32 %v115, %v131
    %v133 = vlaneseq
    %v134 = vshrl.u32 %v133, 7
    %v135 = vsub.s32 0, %v134
    %v136 = vrot.slane %v105, %v135
    %v137 = vadd.f32 %v132, %v136
    %v138 = vmax.f32 %v137, 0.0
    %139 = vst.msk [vmem:[#allocation7] sm:$0xff] %vm106, %v138
    %141 = vrot.lane.b32.xlu0 %v42, 64
    %v142 = vpop.permute.xlu0 %141
    %vm144 = vcmask 785920
    %145 = vst.msk [vmem:[#allocation7] sm:$0xff] %vm144, %v142
    // Predicated region
    $region22: #{tpu_custom_call.1} parent=1 // pred_check
      _
    $region23: #{tpu_custom_call.1} parent=1 // pred_check_branch
      %147 = sbr.rel (0) target = $region25
    $region24: #{tpu_custom_call.1} parent=1 // pred_region
      %s149 = ssub.s32 128, 128
      %150 = vsyncadd [#allocation4], %s149
      %s152 = sshll.u32 [#allocation7], 4
      %s153 = int_to_ptr.vmem [resolvable:$true] %s152
      %155 = dma.vmem_to_hbm [thread:$0]  %s153, 128, %s3, [#allocation4]
    $region25: #{tpu_custom_call.1} parent=1 // pred_fallthru
      _
    // Predicated region
    $region26: #{tpu_custom_call.1} parent=1 // pred_check
      _
    $region27: #{tpu_custom_call.1} parent=1 // pred_check_branch
      %157 = sbr.rel (0) target = $region29
    $region28: #{tpu_custom_call.1} parent=1 // pred_region
      %158 = dma.done [#allocation4], 128
    $region29: #{tpu_custom_call.1} parent=1 // pred_fallthru
      _
    %159 = vsyncpa [#allocation3], 1
    %160 = vsyncpa [#allocation6], 1
    %161 = vsyncpa [#allocation4], 1

</llo_original>
